<compile_context>
chip_gen: v6e
topology: v6e:2x2x1
jax: 0.10.0
libtpu: 0.0.40
codegen_flags: <defaults>
</compile_context>

<pallas_src>
import functools

import jax
import jax.numpy as jnp
from jax.experimental import pallas as pl
from jax.experimental.pallas import tpu as pltpu

HIDDEN = 256
NEG_SLOPE = 0.01  # nn.LeakyReLU default negative_slope
LANE = 128


def _round_up(x: int, m: int) -> int:
    return ((x + m - 1) // m) * m


def _mlp_kernel(x_ref, w1_ref, b1_ref, w2_ref, b2_ref, o_ref):
    # layer1: x @ W1  (MXU, f32 accumulate), bias + LeakyReLU in f32 on VPU.
    h = jnp.dot(x_ref[...], w1_ref[...], preferred_element_type=jnp.float32)
    h = h + b1_ref[...]                       # b1 is (1, HIDDEN) f32, broadcasts
    h = jnp.where(h > 0, h, NEG_SLOPE * h)    # LeakyReLU
    # layer2: cast only at the MXU input (no-op when weights are f32).
    w2 = w2_ref[...]
    p = h if w2.dtype == h.dtype else h.astype(w2.dtype)
    out = jnp.dot(p, w2, preferred_element_type=jnp.float32)
    out = out + b2_ref[...]                   # b2 is (1, N_pad) f32
    o_ref[...] = out.astype(o_ref.dtype)


def prepare_params(w1, b1, w2, b2, mxu_dtype=jnp.float32):
    """One-time preprocessing: pad to lane-dense shapes, pick MXU dtype.

    w1: (input_size, 256), b1: (256,), w2: (256, num_classes), b2: (num_classes,)
    Padding rows of w1 / cols of w2 with zeros leaves the math unchanged.
    """
    input_size, hidden = w1.shape
    assert hidden == HIDDEN and w2.shape == (HIDDEN, b2.shape[0])
    num_classes = w2.shape[1]
    k_pad = _round_up(max(input_size, 1), LANE)
    n_pad = _round_up(max(num_classes, 1), LANE)

    w1_p = jnp.zeros((k_pad, HIDDEN), mxu_dtype).at[:input_size, :].set(
        w1.astype(mxu_dtype))
    w2_p = jnp.zeros((HIDDEN, n_pad), mxu_dtype).at[:, :num_classes].set(
        w2.astype(mxu_dtype))
    # Biases stay f32: they are added after the f32-accumulating dot.
    b1_p = b1.astype(jnp.float32).reshape(1, HIDDEN)
    b2_p = jnp.zeros((1, n_pad), jnp.float32).at[0, :num_classes].set(
        b2.astype(jnp.float32))

    return {
        "w1": w1_p, "b1": b1_p, "w2": w2_p, "b2": b2_p,
        "input_size": input_size, "num_classes": num_classes,
        "k_pad": k_pad, "n_pad": n_pad, "mxu_dtype": mxu_dtype,
    }


@functools.partial(jax.jit, static_argnames=("block_b",))
def _forward_impl(x, w1, b1, w2, b2, *, block_b):
    b_total, k_pad = x.shape
    n_pad = w2.shape[1]
    grid = (pl.cdiv(b_total, block_b),)
    return pl.pallas_call(
        _mlp_kernel,
        out_shape=jax.ShapeDtypeStruct((b_total, n_pad), jnp.float32),
        grid=grid,
        in_specs=[
            # x tile streams over the batch; weights/biases stay resident.
            pl.BlockSpec((block_b, k_pad), lambda i: (i, 0)),
            pl.BlockSpec((k_pad, HIDDEN), lambda i: (0, 0)),
            pl.BlockSpec((1, HIDDEN), lambda i: (0, 0)),
            pl.BlockSpec((HIDDEN, n_pad), lambda i: (0, 0)),
            pl.BlockSpec((1, n_pad), lambda i: (0, 0)),
        ],
        out_specs=pl.BlockSpec((block_b, n_pad), lambda i: (i, 0)),
        compiler_params=pltpu.CompilerParams(
            dimension_semantics=("parallel",),   # megacore split on v7x
        ),
    )(x, w1, b1, w2, b2)


def rede_ia_forward(x, params, *, block_b=512):
    """Fused forward. x: (B, input_size) -> (B, num_classes)."""
    B, in_size = x.shape
    assert in_size == params["input_size"]
    k_pad, n_pad = params["k_pad"], params["n_pad"]
    mxu_dtype = params["mxu_dtype"]
    out_dtype = x.dtype

    # Batch tile: as large as available (sweet spot 512+), but never more
    # than the (8-row aligned) batch itself.  Tiny footprint -> fits the
    # default scoped VMEM limit on all of v5e/v6e/v7x.
    tb = min(block_b, _round_up(B, 8))
    b_pad = _round_up(B, tb)

    # Zero-pad batch rows and feature columns (zeros don't change the dot).
    x_p = jnp.zeros((b_pad, k_pad), mxu_dtype).at[:B, :in_size].set(
        x.astype(mxu_dtype))

    out = _forward_impl(x_p, params["w1"], params["b1"],
                        params["w2"], params["b2"], block_b=tb)
    return out[:B, :params["num_classes"]].astype(out_dtype)


def init_params(key, input_size, num_classes, dtype=jnp.float32):
    """Deterministic init mimicking PyTorch nn.Linear (uniform +-1/sqrt(fan_in))."""
    k1, k2, k3, k4 = jax.random.split(key, 4)
    bound1 = 1.0 / jnp.sqrt(jnp.array(input_size, dtype))
    bound2 = 1.0 / jnp.sqrt(jnp.array(HIDDEN, dtype))
    w1 = jax.random.uniform(k1, (input_size, HIDDEN), dtype, -bound1, bound1)
    b1 = jax.random.uniform(k2, (HIDDEN,), dtype, -bound1, bound1)
    w2 = jax.random.uniform(k3, (HIDDEN, num_classes), dtype, -bound2, bound2)
    b2 = jax.random.uniform(k4, (num_classes,), dtype, -bound2, bound2)
    return w1, b1, w2, b2


def reference_forward(x, w1, b1, w2, b2):
    h = x @ w1 + b1
    h = jnp.where(h > 0, h, NEG_SLOPE * h)
    return h @ w2 + b2


if __name__ == "__main__":
    key = jax.random.PRNGKey(0)
    input_size, num_classes = 32, 16
    kx, kx2, kp = jax.random.split(key, 3)
    w1, b1, w2, b2 = init_params(kp, input_size, num_classes)

    # --- small batch, f32 MXU path (exact-ish vs reference) -----------------
    x_small = jax.random.normal(kx, (8, input_size), jnp.float32)
    params_f32 = prepare_params(w1, b1, w2, b2, mxu_dtype=jnp.float32)
    out_small = jax.block_until_ready(rede_ia_forward(x_small, params_f32))
    ref_small = reference_forward(x_small, w1, b1, w2, b2)
    assert out_small.shape == (8, num_classes)
    assert jnp.allclose(out_small, ref_small, atol=1e-4, rtol=1e-4)

    # --- larger batch exercising the tiled / pipelined path ------------------
    x_big = jax.random.normal(kx2, (1024, input_size), jnp.float32)
    out_big = jax.block_until_ready(rede_ia_forward(x_big, params_f32))
    ref_big = reference_forward(x_big, w1, b1, w2, b2)
    assert out_big.shape == (1024, num_classes)
    assert jnp.allclose(out_big, ref_big, atol=1e-4, rtol=1e-4)

    # --- bf16 MXU operands (v6e/v7x fast path), f32 accumulate/epilogue ------
    params_bf16 = prepare_params(w1, b1, w2, b2, mxu_dtype=jnp.bfloat16)
    out_bf16 = jax.block_until_ready(rede_ia_forward(x_big, params_bf16))
    assert out_bf16.shape == (1024, num_classes)
    assert bool(jnp.all(jnp.isfinite(out_bf16)))
    assert float(jnp.max(jnp.abs(out_bf16 - ref_big))) < 0.25  # bf16 tolerance

    print("KERNEL_OK")
</pallas_src>

<mosaic_0001>
module attributes {stable_mosaic.version = 11 : i64} {
  func.func @_mlp_kernel(%arg0: i32, %arg1: memref<8x128xf32, #tpu.memory_space<vmem>>, %arg2: memref<128x256xf32, #tpu.memory_space<vmem>>, %arg3: memref<1x256xf32, #tpu.memory_space<vmem>>, %arg4: memref<256x128xf32, #tpu.memory_space<vmem>>, %arg5: memref<1x128xf32, #tpu.memory_space<vmem>>, %arg6: memref<8x128xf32, #tpu.memory_space<vmem>>) attributes {dimension_semantics = [#tpu.dimension_semantics<parallel>], iteration_bounds = array<i64: 1>, scalar_prefetch = 0 : i64, scratch_operands = 0 : i64, tpu.core_type = #tpu.core_type<tc>, window_params = [{transform_indices = @transform_0, window_bounds = array<i64: 8, 128>}, {pipeline_mode = #tpu.pipeline_mode<synchronous>, transform_indices = @transform_1, window_bounds = array<i64: 128, 256>}, {pipeline_mode = #tpu.pipeline_mode<synchronous>, transform_indices = @transform_2, window_bounds = array<i64: 1, 256>}, {pipeline_mode = #tpu.pipeline_mode<synchronous>, transform_indices = @transform_3, window_bounds = array<i64: 256, 128>}, {pipeline_mode = #tpu.pipeline_mode<synchronous>, transform_indices = @transform_4, window_bounds = array<i64: 1, 128>}, {transform_indices = @transform_5, window_bounds = array<i64: 8, 128>}]} {
    %c0 = arith.constant 0 : index
    %c0_0 = arith.constant 0 : index
    %0 = vector.load %arg1[%c0, %c0_0] : memref<8x128xf32, #tpu.memory_space<vmem>>, vector<8x128xf32>
    %c0_1 = arith.constant 0 : index
    %c0_2 = arith.constant 0 : index
    %1 = vector.load %arg2[%c0_1, %c0_2] : memref<128x256xf32, #tpu.memory_space<vmem>>, vector<128x256xf32>
    %cst = arith.constant dense<0.000000e+00> : vector<8x256xf32>
    %2 = tpu.matmul %0, %1, %cst {dimension_numbers = #tpu.dot_dimension_numbers<[1], [0], [0], [1], [0, 0, 1, 1], [], []>} : vector<8x128xf32>, vector<128x256xf32>, vector<8x256xf32> -> vector<8x256xf32>
    %c0_3 = arith.constant 0 : index
    %c0_4 = arith.constant 0 : index
    %3 = vector.load %arg3[%c0_3, %c0_4] : memref<1x256xf32, #tpu.memory_space<vmem>>, vector<1x256xf32>
    %4 = vector.broadcast %3 : vector<1x256xf32> to vector<8x256xf32>
    %5 = arith.addf %2, %4 : vector<8x256xf32>
    %cst_5 = arith.constant 0.000000e+00 : f32
    %6 = vector.broadcast %cst_5 : f32 to vector<8x256xf32>
    %7 = arith.cmpf ogt, %5, %6 : vector<8x256xf32>
    %cst_6 = arith.constant 0.00999999977 : f32
    %8 = vector.broadcast %cst_6 : f32 to vector<8x256xf32>
    %9 = arith.mulf %8, %5 : vector<8x256xf32>
    %10 = arith.select %7, %5, %9 : vector<8x256xi1>, vector<8x256xf32>
    %c0_7 = arith.constant 0 : index
    %c0_8 = arith.constant 0 : index
    %11 = vector.load %arg4[%c0_7, %c0_8] : memref<256x128xf32, #tpu.memory_space<vmem>>, vector<256x128xf32>
    %cst_9 = arith.constant dense<0.000000e+00> : vector<8x128xf32>
    %12 = tpu.matmul %10, %11, %cst_9 {dimension_numbers = #tpu.dot_dimension_numbers<[1], [0], [0], [1], [0, 0, 1, 1], [], []>} : vector<8x256xf32>, vector<256x128xf32>, vector<8x128xf32> -> vector<8x128xf32>
    %c0_10 = arith.constant 0 : index
    %c0_11 = arith.constant 0 : index
    %13 = vector.load %arg5[%c0_10, %c0_11] : memref<1x128xf32, #tpu.memory_space<vmem>>, vector<1x128xf32>
    %14 = vector.broadcast %13 : vector<1x128xf32> to vector<8x128xf32>
    %15 = arith.addf %12, %14 : vector<8x128xf32>
    %c0_12 = arith.constant 0 : index
    %c0_13 = arith.constant 0 : index
    %16 = vector.load %arg6[%c0_12, %c0_13] : memref<8x128xf32, #tpu.memory_space<vmem>>, vector<8x128xf32>
    tpu.vector_store %arg6[%c0_12, %c0_13], %15 {strides = array<i32>} : memref<8x128xf32, #tpu.memory_space<vmem>>, vector<8x128xf32>,
    return
  }
  func.func @transform_0(%arg0: i32) -> (i32, i32) {
    %c0_i32 = arith.constant 0 : i32
    %c0_i32_0 = arith.constant 0 : i32
    return %arg0, %c0_i32 : i32, i32
  }
  func.func @transform_1(%arg0: i32) -> (i32, i32) {
    %c0_i32 = arith.constant 0 : i32
    %c0_i32_0 = arith.constant 0 : i32
    %c0_i32_1 = arith.constant 0 : i32
    return %c0_i32, %c0_i32_0 : i32, i32
  }
  func.func @transform_2(%arg0: i32) -> (i32, i32) {
    %c0_i32 = arith.constant 0 : i32
    %c0_i32_0 = arith.constant 0 : i32
    %c0_i32_1 = arith.constant 0 : i32
    return %c0_i32, %c0_i32_0 : i32, i32
  }
  func.func @transform_3(%arg0: i32) -> (i32, i32) {
    %c0_i32 = arith.constant 0 : i32
    %c0_i32_0 = arith.constant 0 : i32
    %c0_i32_1 = arith.constant 0 : i32
    return %c0_i32, %c0_i32_0 : i32, i32
  }
  func.func @transform_4(%arg0: i32) -> (i32, i32) {
    %c0_i32 = arith.constant 0 : i32
    %c0_i32_0 = arith.constant 0 : i32
    %c0_i32_1 = arith.constant 0 : i32
    return %c0_i32, %c0_i32_0 : i32, i32
  }
  func.func @transform_5(%arg0: i32) -> (i32, i32) {
    %c0_i32 = arith.constant 0 : i32
    %c0_i32_0 = arith.constant 0 : i32
    return %arg0, %c0_i32 : i32, i32
  }
}

</mosaic_0001>

<llo_original>
// kernel: _forward_impl.1
$region0: #{_forward_impl.1}
  #allocation0 [shape = 'u32[]', space=smem, size = 0x4, offset = 0x4, fixed_abs, tag = 'smem constant byte address 0x4 - core index']
  #allocation1 [shape = 'u32[144,128]{1,0:T(1,128)}', space=vmem, size = 0x12000, scoped, tag = 'internal scratch']
  %s0 = inlined_call_operand.hbm [shape: f32[8,128], index: 0, kind: input, shape index: {}]
  %s1 = inlined_call_operand.hbm [shape: f32[128,256], index: 1, kind: input, shape index: {}]
  %s2 = inlined_call_operand.vmem [shape: f32[1,256], index: 2, kind: input, shape index: {}]
  %s3 = inlined_call_operand.hbm [shape: f32[256,128], index: 3, kind: input, shape index: {}]
  %s4 = inlined_call_operand.vmem [shape: f32[1,128], index: 4, kind: input, shape index: {}]
  %s5 = inlined_call_operand.hbm [shape: f32[8,128], index: 5, kind: output, shape index: {}]
  %s6 = sld [smem:[#allocation0]]
  $region42: #{_forward_impl.1} parent=0
    _
  %s8 = ssub.s32 1, %s6
  %s9 = scalar_select 0, %s8, %s6
  $region1: #{_forward_impl.1} parent=0
    #allocation2 [shape = 'u8[4096]{0}', space=vmem, size = 0x1000, scoped, tag = 'input window, operand 0, single buffered']
    #allocation3 [shape = 's32[1]{0}', space=sflag, size = 0x4, scoped, tag = 'scoped memory for _forward_impl.1']
    #allocation4 [shape = 's32[1]{0}', space=sflag, size = 0x4, scoped, tag = 'scoped memory for _forward_impl.1']
    #allocation5 [shape = 'u8[131072]{0}', space=vmem, size = 0x20000, scoped, tag = 'input window, operand 1, single buffered']
    #allocation6 [shape = 's32[1]{0}', space=sflag, size = 0x4, scoped, tag = 'scoped memory for _forward_impl.1']
    #allocation7 [shape = 'u8[131072]{0}', space=vmem, size = 0x20000, scoped, tag = 'input window, operand 3, single buffered']
    #allocation8 [shape = 'u8[4096]{0}', space=vmem, size = 0x1000, scoped, tag = 'output window, operand 0, single buffered']
    %10 = vsyncpa [#allocation3], 0
    %11 = vsyncpa [#allocation6], 0
    %12 = vsyncpa [#allocation4], 0
    // Predicated region
    $region2: #{_forward_impl.1} parent=1 // pred_check
      _
    $region3: #{_forward_impl.1} parent=1 // pred_check_branch
      %14 = sbr.rel (0) target = $region5
    $region4: #{_forward_impl.1} parent=1 // pred_region
      %s16 = ssub.s32 128, 128
      %17 = vsyncadd [#allocation3], %s16
      %s19 = sshll.u32 [#allocation2], 4
      %s20 = int_to_ptr.vmem [resolvable:$true] %s19
      %22 = dma.hbm_to_vmem [thread:$0]  %s0, 128, %s20, [#allocation3]
    $region5: #{_forward_impl.1} parent=1 // pred_fallthru
      _
    // Predicated region
    $region6: #{_forward_impl.1} parent=1 // pred_check
      _
    $region7: #{_forward_impl.1} parent=1 // pred_check_branch
      %24 = sbr.rel (0) target = $region9
    $region8: #{_forward_impl.1} parent=1 // pred_region
      %s26 = ssub.s32 4096, 4096
      %27 = vsyncadd [#allocation6], %s26
      %s28 = sshll.u32 [#allocation5], 4
      %s29 = int_to_ptr.vmem [resolvable:$true] %s28
      %34 = dma.hbm_to_vmem [thread:$0]  %s1, 4096, %s29, [#allocation6], 256, 256, 16
    $region9: #{_forward_impl.1} parent=1 // pred_fallthru
      _
    // Predicated region
    $region10: #{_forward_impl.1} parent=1 // pred_check
      _
    $region11: #{_forward_impl.1} parent=1 // pred_check_branch
      %36 = sbr.rel (0) target = $region13
    $region12: #{_forward_impl.1} parent=1 // pred_region
      _
    $region13: #{_forward_impl.1} parent=1 // pred_fallthru
      _
    // Predicated region
    $region14: #{_forward_impl.1} parent=1 // pred_check
      _
    $region15: #{_forward_impl.1} parent=1 // pred_check_branch
      %38 = sbr.rel (0) target = $region17
    $region16: #{_forward_impl.1} parent=1 // pred_region
      %s40 = ssub.s32 4096, 4096
      %41 = vsyncadd [#allocation6], %s40
      %s42 = sshll.u32 [#allocation7], 4
      %s43 = int_to_ptr.vmem [resolvable:$true] %s42
      %48 = dma.hbm_to_vmem [thread:$0]  %s3, 4096, %s43, [#allocation6], 128, 128, 8
    $region17: #{_forward_impl.1} parent=1 // pred_fallthru
      _
    // Predicated region
    $region18: #{_forward_impl.1} parent=1 // pred_check
      _
    $region19: #{_forward_impl.1} parent=1 // pred_check_branch
      %50 = sbr.rel (0) target = $region21
    $region20: #{_forward_impl.1} parent=1 // pred_region
      _
    $region21: #{_forward_impl.1} parent=1 // pred_fallthru
      _
    // Predicated region
    $region22: #{_forward_impl.1} parent=1 // pred_check
      _
    $region23: #{_forward_impl.1} parent=1 // pred_check_branch
      %52 = sbr.rel (0) target = $region25
    $region24: #{_forward_impl.1} parent=1 // pred_region
      %53 = dma.done [#allocation3], 128
    $region25: #{_forward_impl.1} parent=1 // pred_fallthru
      _
    // Predicated region
    $region26: #{_forward_impl.1} parent=1 // pred_check
      _
    $region27: #{_forward_impl.1} parent=1 // pred_check_branch
      %55 = sbr.rel (0) target = $region29
    $region28: #{_forward_impl.1} parent=1 // pred_region
      %56 = dma.done [#allocation6], 4096
    $region29: #{_forward_impl.1} parent=1 // pred_fallthru
      _
    // Predicated region
    $region30: #{_forward_impl.1} parent=1 // pred_check
      _
    $region31: #{_forward_impl.1} parent=1 // pred_check_branch
      %58 = sbr.rel (0) target = $region33
    $region32: #{_forward_impl.1} parent=1 // pred_region
      %59 = dma.done [#allocation6], 4096
    $region33: #{_forward_impl.1} parent=1 // pred_fallthru
      _
    %v60 = vld [vmem:[#allocation2] sm:$0xff]
    %v61 = vld [vmem:[#allocation5] sm:$0xff]
    %v62 = vld [vmem:[#allocation5 + $0x8] sm:$0xff]
    %v63 = vld [vmem:[#allocation5 + $0x10] sm:$0xff]
    %v64 = vld [vmem:[#allocation5 + $0x18] sm:$0xff]
    %v65 = vld [vmem:[#allocation5 + $0x20] sm:$0xff]
    %v66 = vld [vmem:[#allocation5 + $0x28] sm:$0xff]
    %v67 = vld [vmem:[#allocation5 + $0x30] sm:$0xff]
    %v68 = vld [vmem:[#allocation5 + $0x38] sm:$0xff]
    %v69 = vld [vmem:[#allocation5 + $0x40] sm:$0xff]
    %v70 = vld [vmem:[#allocation5 + $0x48] sm:$0xff]
    %v71 = vld [vmem:[#allocation5 + $0x50] sm:$0xff]
    %v72 = vld [vmem:[#allocation5 + $0x58] sm:$0xff]
    %v73 = vld [vmem:[#allocation5 + $0x60] sm:$0xff]
    %v74 = vld [vmem:[#allocation5 + $0x68] sm:$0xff]
    %v75 = vld [vmem:[#allocation5 + $0x70] sm:$0xff]
    %v76 = vld [vmem:[#allocation5 + $0x78] sm:$0xff]
    %v77 = vld [vmem:[#allocation5 + $0x80] sm:$0xff]
    %v78 = vld [vmem:[#allocation5 + $0x88] sm:$0xff]
    %v79 = vld [vmem:[#allocation5 + $0x90] sm:$0xff]
    %v80 = vld [vmem:[#allocation5 + $0x98] sm:$0xff]
    %v81 = vld [vmem:[#allocation5 + $0xa0] sm:$0xff]
    %v82 = vld [vmem:[#allocation5 + $0xa8] sm:$0xff]
    %v83 = vld [vmem:[#allocation5 + $0xb0] sm:$0xff]
    %v84 = vld [vmem:[#allocation5 + $0xb8] sm:$0xff]
    %v85 = vld [vmem:[#allocation5 + $0xc0] sm:$0xff]
    %v86 = vld [vmem:[#allocation5 + $0xc8] sm:$0xff]
    %v87 = vld [vmem:[#allocation5 + $0xd0] sm:$0xff]
    %v88 = vld [vmem:[#allocation5 + $0xd8] sm:$0xff]
    %v89 = vld [vmem:[#allocation5 + $0xe0] sm:$0xff]
    %v90 = vld [vmem:[#allocation5 + $0xe8] sm:$0xff]
    %v91 = vld [vmem:[#allocation5 + $0xf0] sm:$0xff]
    %v92 = vld [vmem:[#allocation5 + $0xf8] sm:$0xff]
    %v93 = vld [vmem:[%s2] sm:$0x3]
    %v95 = vlaneseq
    %v96 = vshrl.u32 %v95, 7
    %v97 = vsub.s32 0, %v96
    %v98 = vrot.slane %v93, %v97
    %v99 = vlaneseq
    %v100 = vshrl.u32 %v99, 7
    %v101 = vsub.s32 1, %v100
    %v102 = vrot.slane %v93, %v101
    %105 = vmatprep.subr.mxu0 %v92
    %106 = vmatpush1.msra.mxu0 %v91
    %107 = vmatprep.subr.mxu0 %v90
    %108 = vmatpush1.msra.mxu0 %v89
    %109 = vmatprep.subr.mxu0 %v88
    %110 = vmatpush1.msra.mxu0 %v87
    %111 = vmatprep.subr.mxu0 %v86
    %112 = vmatpush1.msra.mxu0 %v85
    %113 = vmatprep.subr.mxu0 %v84
    %114 = vmatpush1.msra.mxu0 %v83
    %115 = vmatprep.subr.mxu0 %v82
    %116 = vmatpush1.msra.mxu0 %v81
    %117 = vmatprep.subr.mxu0 %v80
    %118 = vmatpush1.msra.mxu0 %v79
    %119 = vmatprep.subr.mxu0 %v78
    %120 = vmatpush1.msra.mxu0 %v77
    %121 = vmatprep.subr.mxu0 %v76
    %122 = vmatpush1.msra.mxu0 %v75
    %123 = vmatprep.subr.mxu0 %v74
    %124 = vmatpush1.msra.mxu0 %v73
    %125 = vmatprep.subr.mxu0 %v72
    %126 = vmatpush1.msra.mxu0 %v71
    %127 = vmatprep.subr.mxu0 %v70
    %128 = vmatpush1.msra.mxu0 %v69
    %129 = vmatprep.subr.mxu0 %v68
    %130 = vmatpush1.msra.mxu0 %v67
    %131 = vmatprep.subr.mxu0 %v66
    %132 = vmatpush1.msra.mxu0 %v65
    %133 = vmatprep.subr.mxu0 %v64
    %134 = vmatpush1.msra.mxu0 %v63
    %135 = vmatprep.subr.mxu0 %v62
    %136 = vmatpush1.msra.mxu0 %v61
    %137 = vmatprep.subr.mxu0 0.0
    %138 = vmatpush2.msra.mxu0 0.0
    %139 = vmatprep.subr.mxu0 0.0
    %140 = vmatpush2.msra.mxu0 0.0
    %141 = vmatprep.subr.mxu0 0.0
    %142 = vmatpush2.msra.mxu0 0.0
    %143 = vmatprep.subr.mxu0 0.0
    %144 = vmatpush2.msra.mxu0 0.0
    %145 = vmatprep.subr.mxu0 0.0
    %146 = vmatpush2.msra.mxu0 0.0
    %147 = vmatprep.subr.mxu0 0.0
    %148 = vmatpush2.msra.mxu0 0.0
    %149 = vmatprep.subr.mxu0 0.0
    %150 = vmatpush2.msra.mxu0 0.0
    %151 = vmatprep.subr.mxu0 0.0
    %152 = vmatpush2.msra.mxu0 0.0
    %153 = vmatprep.subr.mxu0 0.0
    %154 = vmatpush2.msra.mxu0 0.0
    %155 = vmatprep.subr.mxu0 0.0
    %156 = vmatpush2.msra.mxu0 0.0
    %157 = vmatprep.subr.mxu0 0.0
    %158 = vmatpush2.msra.mxu0 0.0
    %159 = vmatprep.subr.mxu0 0.0
    %160 = vmatpush2.msra.mxu0 0.0
    %161 = vmatprep.subr.mxu0 0.0
    %162 = vmatpush2.msra.mxu0 0.0
    %163 = vmatprep.subr.mxu0 0.0
    %164 = vmatpush2.msra.mxu0 0.0
    %165 = vmatprep.subr.mxu0 0.0
    %166 = vmatpush2.msra.mxu0 0.0
    %167 = vmatprep.subr.mxu0 0.0
    %168 = vmatpush2.msra.mxu0 0.0
    %169 = vmatprep.mubr.f32.mxu0 0.0
    %170 = vmatmul.mubr.f32.gmra.mxu0 %v60
    %v171 = vpop.f32.mrf.mxu0
    %v172 = vadd.f32 %v98, %v171
    %v173 = vpop.f32.mrf.mxu0
    %v174 = vadd.f32 %v102, %v173
    %175 = vdwg.mxu0
    %vm176 = vcmp.gt.f32.partialorder %v172, 0.0
    %vm177 = vcmp.gt.f32.partialorder %v174, 0.0
    %v178 = vmul.f32 %v172, 0.01
    %v179 = vmul.f32 %v174, 0.01
    %v180 = vsel %vm176, %v172, %v178
    %v181 = vsel %vm177, %v174, %v179
    %v182 = vld [vmem:[#allocation7] sm:$0xff]
    %v183 = vld [vmem:[#allocation7 + $0x8] sm:$0xff]
    %v184 = vld [vmem:[#allocation7 + $0x10] sm:$0xff]
    %v185 = vld [vmem:[#allocation7 + $0x18] sm:$0xff]
    %v186 = vld [vmem:[#allocation7 + $0x20] sm:$0xff]
    %v187 = vld [vmem:[#allocation7 + $0x28] sm:$0xff]
    %v188 = vld [vmem:[#allocation7 + $0x30] sm:$0xff]
    %v189 = vld [vmem:[#allocation7 + $0x38] sm:$0xff]
    %v190 = vld [vmem:[#allocation7 + $0x40] sm:$0xff]
    %v191 = vld [vmem:[#allocation7 + $0x48] sm:$0xff]
    %v192 = vld [vmem:[#allocation7 + $0x50] sm:$0xff]
    %v193 = vld [vmem:[#allocation7 + $0x58] sm:$0xff]
    %v194 = vld [vmem:[#allocation7 + $0x60] sm:$0xff]
    %v195 = vld [vmem:[#allocation7 + $0x68] sm:$0xff]
    %v196 = vld [vmem:[#allocation7 + $0x70] sm:$0xff]
    %v197 = vld [vmem:[#allocation7 + $0x78] sm:$0xff]
    %v198 = vld [vmem:[#allocation7 + $0x80] sm:$0xff]
    %v199 = vld [vmem:[#allocation7 + $0x88] sm:$0xff]
    %v200 = vld [vmem:[#allocation7 + $0x90] sm:$0xff]
    %v201 = vld [vmem:[#allocation7 + $0x98] sm:$0xff]
    %v202 = vld [vmem:[#allocation7 + $0xa0] sm:$0xff]
    %v203 = vld [vmem:[#allocation7 + $0xa8] sm:$0xff]
    %v204 = vld [vmem:[#allocation7 + $0xb0] sm:$0xff]
    %v205 = vld [vmem:[#allocation7 + $0xb8] sm:$0xff]
    %v206 = vld [vmem:[#allocation7 + $0xc0] sm:$0xff]
    %v207 = vld [vmem:[#allocation7 + $0xc8] sm:$0xff]
    %v208 = vld [vmem:[#allocation7 + $0xd0] sm:$0xff]
    %v209 = vld [vmem:[#allocation7 + $0xd8] sm:$0xff]
    %v210 = vld [vmem:[#allocation7 + $0xe0] sm:$0xff]
    %v211 = vld [vmem:[#allocation7 + $0xe8] sm:$0xff]
    %v212 = vld [vmem:[#allocation7 + $0xf0] sm:$0xff]
    %v213 = vld [vmem:[#allocation7 + $0xf8] sm:$0xff]
    %v214 = vld [vmem:[%s4] sm:$0x1]
    %v216 = vlaneseq
    %v217 = vshrl.u32 %v216, 7
    %v218 = vsub.s32 0, %v217
    %v219 = vrot.slane %v214, %v218
    %221 = vmatprep.subr.mxu0 0.0
    %222 = vmatpush1.msra.mxu0 %v197
    %223 = vmatprep.subr.mxu0 0.0
    %224 = vmatpush1.msra.mxu0 %v196
    %225 = vmatprep.subr.mxu0 0.0
    %226 = vmatpush1.msra.mxu0 %v195
    %227 = vmatprep.subr.mxu0 0.0
    %228 = vmatpush1.msra.mxu0 %v194
    %229 = vmatprep.subr.mxu0 0.0
    %230 = vmatpush1.msra.mxu0 %v193
    %231 = vmatprep.subr.mxu0 0.0
    %232 = vmatpush1.msra.mxu0 %v192
    %233 = vmatprep.subr.mxu0 0.0
    %234 = vmatpush1.msra.mxu0 %v191
    %235 = vmatprep.subr.mxu0 0.0
    %236 = vmatpush1.msra.mxu0 %v190
    %237 = vmatprep.subr.mxu0 0.0
    %238 = vmatpush1.msra.mxu0 %v189
    %239 = vmatprep.subr.mxu0 0.0
    %240 = vmatpush1.msra.mxu0 %v188
    %241 = vmatprep.subr.mxu0 0.0
    %242 = vmatpush1.msra.mxu0 %v187
    %243 = vmatprep.subr.mxu0 0.0
    %244 = vmatpush1.msra.mxu0 %v186
    %245 = vmatprep.subr.mxu0 0.0
    %246 = vmatpush1.msra.mxu0 %v185
    %247 = vmatprep.subr.mxu0 0.0
    %248 = vmatpush1.msra.mxu0 %v184
    %249 = vmatprep.subr.mxu0 0.0
    %250 = vmatpush1.msra.mxu0 %v183
    %251 = vmatprep.subr.mxu0 0.0
    %252 = vmatpush1.msra.mxu0 %v182
    %253 = vmatprep.subr.mxu0 0.0
    %254 = vmatpush2.msra.mxu0 %v213
    %255 = vmatprep.subr.mxu0 0.0
    %256 = vmatpush2.msra.mxu0 %v212
    %257 = vmatprep.subr.mxu0 0.0
    %258 = vmatpush2.msra.mxu0 %v211
    %259 = vmatprep.subr.mxu0 0.0
    %260 = vmatpush2.msra.mxu0 %v210
    %261 = vmatprep.subr.mxu0 0.0
    %262 = vmatpush2.msra.mxu0 %v209
    %263 = vmatprep.subr.mxu0 0.0
    %264 = vmatpush2.msra.mxu0 %v208
    %265 = vmatprep.subr.mxu0 0.0
    %266 = vmatpush2.msra.mxu0 %v207
    %267 = vmatprep.subr.mxu0 0.0
    %268 = vmatpush2.msra.mxu0 %v206
    %269 = vmatprep.subr.mxu0 0.0
    %270 = vmatpush2.msra.mxu0 %v205
    %271 = vmatprep.subr.mxu0 0.0
    %272 = vmatpush2.msra.mxu0 %v204
    %273 = vmatprep.subr.mxu0 0.0
    %274 = vmatpush2.msra.mxu0 %v203
    %275 = vmatprep.subr.mxu0 0.0
    %276 = vmatpush2.msra.mxu0 %v202
    %277 = vmatprep.subr.mxu0 0.0
    %278 = vmatpush2.msra.mxu0 %v201
    %279 = vmatprep.subr.mxu0 0.0
    %280 = vmatpush2.msra.mxu0 %v200
    %281 = vmatprep.subr.mxu0 0.0
    %282 = vmatpush2.msra.mxu0 %v199
    %283 = vmatprep.subr.mxu0 0.0
    %284 = vmatpush2.msra.mxu0 %v198
    %285 = vmatprep.mubr.f32.mxu0 %v181
    %286 = vmatmul.mubr.f32.gmra.mxu0 %v180
    %v287 = vpop.f32.mrf.mxu0
    %v288 = vadd.f32 %v219, %v287
    %v289 = vpop.f32.mrf.mxu0
    %290 = vdwg.mxu0
    %291 = vst [vmem:[#allocation8] sm:$0xff] %v288
    // Predicated region
    $region34: #{_forward_impl.1} parent=1 // pred_check
      _
    $region35: #{_forward_impl.1} parent=1 // pred_check_branch
      %293 = sbr.rel (0) target = $region37
    $region36: #{_forward_impl.1} parent=1 // pred_region
      %s295 = ssub.s32 128, 128
      %296 = vsyncadd [#allocation4], %s295
      %s298 = sshll.u32 [#allocation8], 4
      %s299 = int_to_ptr.vmem [resolvable:$true] %s298
      %301 = dma.vmem_to_hbm [thread:$0]  %s299, 128, %s5, [#allocation4]
    $region37: #{_forward_impl.1} parent=1 // pred_fallthru
      _
    // Predicated region
    $region38: #{_forward_impl.1} parent=1 // pred_check
      _
    $region39: #{_forward_impl.1} parent=1 // pred_check_branch
      %303 = sbr.rel (0) target = $region41
    $region40: #{_forward_impl.1} parent=1 // pred_region
      %304 = dma.done [#allocation4], 128
    $region41: #{_forward_impl.1} parent=1 // pred_fallthru
      _
    %305 = vsyncpa [#allocation3], 1
    %306 = vsyncpa [#allocation6], 1
    %307 = vsyncpa [#allocation4], 1

</llo_original>
